<compile_context>
chip_gen: v7x
topology: tpu7x:2x2x1
jax: 0.10.0
libtpu: 0.0.40
codegen_flags: <defaults>
</compile_context>

<pallas_src>
import numpy as np
import jax
import jax.numpy as jnp
from jax.experimental import pallas as pl
from jax.experimental.pallas import tpu as pltpu

LANES = 128            # rays per lane row
SUB = 8                # sublane rows (one full f32 vreg) processed per chunk
MAX_BLOCK_ROWS = 256   # rows per grid step -> up to 32K rays / step


def _pose_apply_kernel(table_ref, idx_ref, org_ref, dir_ref,
                       new_org_ref, new_dir_ref):
    """One grid step: gather SO3xR3 tangents, exponentiate, apply to rays.

    table_ref : (num_cameras*6,) f32 in SMEM, row-major [cam, (tx,ty,tz,wx,wy,wz)]
    idx_ref   : (block_rows, 128) int32   per-ray camera index
    org_ref   : (3, block_rows, 128) f32  ray origins,   component-major
    dir_ref   : (3, block_rows, 128) f32  ray directions, component-major
    """
    block_rows = idx_ref.shape[0]
    n_cams = table_ref.shape[0] // 6

    # Hoist the tiny pose table into scalar values once per grid step.
    tbl = [[table_ref[cam * 6 + c] for c in range(6)] for cam in range(n_cams)]

    # Process SUB sublane-rows (SUB*128 rays) at a time so the ~20 live per-ray
    # temporaries stay in vregs instead of spilling large VMEM intermediates.
    for r0 in range(0, block_rows, SUB):
        r1 = r0 + SUB
        idx = idx_ref[r0:r1, :]                        # (SUB, 128) int32

        # --- fused gather: pose_adjustment[camera_index] via select-sum ------
        # TODO(synk): for very large camera counts (>~100) a host-side gather or
        # MXU one-hot matmul would scale better than this per-camera select loop.
        t = [jnp.zeros(idx.shape, jnp.float32) for _ in range(6)]
        for cam in range(n_cams):
            m = idx == cam
            for c in range(6):
                t[c] = jnp.where(m, tbl[cam][c], t[c])
        tx, ty, tz, wx, wy, wz = t

        # --- exp_map_SO3xR3 (same branch structure as theseus / nerfstudio) --
        theta2 = wx * wx + wy * wy + wz * wz
        theta = jnp.sqrt(theta2)
        near_zero = theta < 1e-2
        theta_nz = jnp.where(near_zero, 1.0, theta)
        theta2_nz = jnp.where(near_zero, 1.0, theta2)
        cosine = jnp.where(near_zero, 8.0 / (4.0 + theta2) - 1.0, jnp.cos(theta))
        sine = jnp.sin(theta)
        sine_by_theta = jnp.where(near_zero, 0.5 * cosine + 0.5, sine / theta_nz)
        omc_by_t2 = jnp.where(near_zero, 0.5 * sine_by_theta,
                              (1.0 - cosine) / theta2_nz)

        r00 = omc_by_t2 * wx * wx + cosine
        r11 = omc_by_t2 * wy * wy + cosine
        r22 = omc_by_t2 * wz * wz + cosine
        r01 = omc_by_t2 * wx * wy - sine_by_theta * wz
        r10 = omc_by_t2 * wy * wx + sine_by_theta * wz
        r02 = omc_by_t2 * wx * wz + sine_by_theta * wy
        r20 = omc_by_t2 * wz * wx - sine_by_theta * wy
        r12 = omc_by_t2 * wy * wz - sine_by_theta * wx
        r21 = omc_by_t2 * wz * wy + sine_by_theta * wx

        ox = org_ref[0, r0:r1, :]
        oy = org_ref[1, r0:r1, :]
        oz = org_ref[2, r0:r1, :]
        dx = dir_ref[0, r0:r1, :]
        dy = dir_ref[1, r0:r1, :]
        dz = dir_ref[2, r0:r1, :]

        # origins + translation column of the correction matrix
        new_org_ref[0, r0:r1, :] = ox + tx
        new_org_ref[1, r0:r1, :] = oy + ty
        new_org_ref[2, r0:r1, :] = oz + tz
        # R @ direction: per-ray 3x3 matvec, unrolled on the VPU.
        new_dir_ref[0, r0:r1, :] = r00 * dx + r01 * dy + r02 * dz
        new_dir_ref[1, r0:r1, :] = r10 * dx + r11 * dy + r12 * dz
        new_dir_ref[2, r0:r1, :] = r20 * dx + r21 * dy + r22 * dz


def _round_up(x, m):
    return ((x + m - 1) // m) * m


@jax.jit
def apply_pose_correction(pose_adjustment, camera_indices, origins, directions):
    """CameraOptimizer.apply_to_raybundle (mode='SO3xR3') on TPU.

    Layout glue (cast / pad / transpose to the component-major (3, rows, 128)
    lane-dense layout) is left to XLA under this jit so it fuses into single
    passes feeding the pallas_call.
    """
    n = origins.shape[0]
    rows = _round_up(pl.cdiv(n, LANES), SUB)
    block_rows = min(MAX_BLOCK_ROWS, rows)
    rows = _round_up(rows, block_rows)
    n_pad = rows * LANES
    pad = n_pad - n

    idx = jnp.pad(camera_indices.reshape(-1).astype(jnp.int32), (0, pad))
    idx = idx.reshape(rows, LANES)
    org = jnp.pad(origins.astype(jnp.float32), ((0, pad), (0, 0)))
    org = org.T.reshape(3, rows, LANES)
    drn = jnp.pad(directions.astype(jnp.float32), ((0, pad), (0, 0)))
    drn = drn.T.reshape(3, rows, LANES)
    table = pose_adjustment.astype(jnp.float32).reshape(-1)

    ray_spec = pl.BlockSpec((3, block_rows, LANES), lambda i: (0, i, 0))
    new_org, new_drn = pl.pallas_call(
        _pose_apply_kernel,
        out_shape=(jax.ShapeDtypeStruct((3, rows, LANES), jnp.float32),
                   jax.ShapeDtypeStruct((3, rows, LANES), jnp.float32)),
        grid=(rows // block_rows,),
        in_specs=[pl.BlockSpec(memory_space=pltpu.MemorySpace.SMEM),  # pose table
                  pl.BlockSpec((block_rows, LANES), lambda i: (i, 0)),
                  ray_spec, ray_spec],
        out_specs=(ray_spec, ray_spec),
        compiler_params=pltpu.CompilerParams(
            dimension_semantics=("parallel",)),
    )(table, idx, org, drn)

    new_org = new_org.reshape(3, n_pad).T[:n]
    new_drn = new_drn.reshape(3, n_pad).T[:n]
    return new_org.astype(origins.dtype), new_drn.astype(directions.dtype)


class PrevNextCamOptimizerPallas:
    """JAX/Pallas analogue of PrevNextCamOptimizer (mode='SO3xR3').

    Holds two (num_cameras, 6) pose adjustments (prev / next) and alternates
    between them on each apply_to_raybundle call, mirroring the PyTorch
    module's cnt_call parity logic.
    """

    def __init__(self, num_cameras: int, key):
        kp, kn = jax.random.split(key)
        # PyTorch initializes pose_adjustment to zeros (identity correction).
        # Use small deterministic random values so the exp-map path is actually
        # exercised numerically.
        self.prev_pose_adjustment = 0.1 * jax.random.normal(
            kp, (num_cameras, 6), jnp.float32)
        self.next_pose_adjustment = 0.1 * jax.random.normal(
            kn, (num_cameras, 6), jnp.float32)
        self.cnt_call = 0

    def apply_to_raybundle(self, camera_indices, origins, directions):
        if self.cnt_call % 2 == 0:
            pa = self.prev_pose_adjustment
        else:
            pa = self.next_pose_adjustment
        self.cnt_call = (self.cnt_call + 1) % 2
        return apply_pose_correction(pa, camera_indices, origins, directions)


def _ref_apply(pa, idx, org, drn):
    """Pure-JAX reference of CameraOptimizer.apply_to_raybundle (SO3xR3)."""
    tv = pa[idx]
    lin, ang = tv[:, :3], tv[:, 3:]
    theta = jnp.linalg.norm(ang, axis=1)
    theta2 = theta * theta
    nz = theta < 1e-2
    theta_nz = jnp.where(nz, 1.0, theta)
    theta2_nz = jnp.where(nz, 1.0, theta2)
    cosine = jnp.where(nz, 8.0 / (4.0 + theta2) - 1.0, jnp.cos(theta))
    sbt = jnp.where(nz, 0.5 * cosine + 0.5, jnp.sin(theta) / theta_nz)
    omc = jnp.where(nz, 0.5 * sbt, (1.0 - cosine) / theta2_nz)
    R = omc[:, None, None] * ang[:, :, None] * ang[:, None, :]
    R = R + cosine[:, None, None] * jnp.eye(3, dtype=jnp.float32)[None]
    t = sbt[:, None] * ang
    skew = jnp.zeros((ang.shape[0], 3, 3), jnp.float32)
    skew = skew.at[:, 0, 1].add(-t[:, 2]).at[:, 1, 0].add(t[:, 2])
    skew = skew.at[:, 0, 2].add(t[:, 1]).at[:, 2, 0].add(-t[:, 1])
    skew = skew.at[:, 1, 2].add(-t[:, 0]).at[:, 2, 1].add(t[:, 0])
    R = R + skew
    return org + lin, jnp.einsum('nij,nj->ni', R, drn)


if __name__ == "__main__":
    key = jax.random.PRNGKey(0)
    k_cam, k_idx, k_org, k_dir = jax.random.split(key, 4)

    num_cameras = 8
    n_rays = 512

    opt = PrevNextCamOptimizerPallas(num_cameras, k_cam)

    camera_indices = jax.random.randint(k_idx, (n_rays,), 0, num_cameras)
    origins = jax.random.normal(k_org, (n_rays, 3), jnp.float32)
    directions = jax.random.normal(k_dir, (n_rays, 3), jnp.float32)
    directions = directions / jnp.linalg.norm(directions, axis=-1, keepdims=True)

    # Call twice: first uses prev_optim (cnt_call=0), second uses next_optim.
    o1, d1 = opt.apply_to_raybundle(camera_indices, origins, directions)
    o2, d2 = opt.apply_to_raybundle(camera_indices, o1, d1)
    jax.block_until_ready((o1, d1, o2, d2))

    # Silent correctness check against a pure-JAX reference.
    ro1, rd1 = _ref_apply(opt.prev_pose_adjustment, camera_indices,
                          origins, directions)
    ro2, rd2 = _ref_apply(opt.next_pose_adjustment, camera_indices, ro1, rd1)
    assert np.allclose(np.asarray(o1), np.asarray(ro1), atol=1e-5)
    assert np.allclose(np.asarray(d1), np.asarray(rd1), atol=1e-5)
    assert np.allclose(np.asarray(o2), np.asarray(ro2), atol=1e-5)
    assert np.allclose(np.asarray(d2), np.asarray(rd2), atol=1e-5)

    print("KERNEL_OK")
</pallas_src>

<mosaic_0001>
module attributes {stable_mosaic.version = 11 : i64} {
  func.func @_pose_apply_kernel(%arg0: i32, %arg1: memref<48xf32, #tpu.memory_space<smem>>, %arg2: memref<8x128xi32, #tpu.memory_space<vmem>>, %arg3: memref<3x8x128xf32, #tpu.memory_space<vmem>>, %arg4: memref<3x8x128xf32, #tpu.memory_space<vmem>>, %arg5: memref<3x8x128xf32, #tpu.memory_space<vmem>>, %arg6: memref<3x8x128xf32, #tpu.memory_space<vmem>>) attributes {dimension_semantics = [#tpu.dimension_semantics<parallel>], iteration_bounds = array<i64: 1>, scalar_prefetch = 0 : i64, scratch_operands = 0 : i64, tpu.core_type = #tpu.core_type<tc>, window_params = [{transform_indices = @transform_0, window_bounds = array<i64: 48>}, {transform_indices = @transform_1, window_bounds = array<i64: 8, 128>}, {transform_indices = @transform_2, window_bounds = array<i64: 3, 8, 128>}, {transform_indices = @transform_3, window_bounds = array<i64: 3, 8, 128>}, {transform_indices = @transform_4, window_bounds = array<i64: 3, 8, 128>}, {transform_indices = @transform_5, window_bounds = array<i64: 3, 8, 128>}]} {
    %c0 = arith.constant 0 : index
    %0 = memref.load %arg1[%c0] : memref<48xf32, #tpu.memory_space<smem>>
    %c1 = arith.constant 1 : index
    %1 = memref.load %arg1[%c1] : memref<48xf32, #tpu.memory_space<smem>>
    %c2 = arith.constant 2 : index
    %2 = memref.load %arg1[%c2] : memref<48xf32, #tpu.memory_space<smem>>
    %c3 = arith.constant 3 : index
    %3 = memref.load %arg1[%c3] : memref<48xf32, #tpu.memory_space<smem>>
    %c4 = arith.constant 4 : index
    %4 = memref.load %arg1[%c4] : memref<48xf32, #tpu.memory_space<smem>>
    %c5 = arith.constant 5 : index
    %5 = memref.load %arg1[%c5] : memref<48xf32, #tpu.memory_space<smem>>
    %c6 = arith.constant 6 : index
    %6 = memref.load %arg1[%c6] : memref<48xf32, #tpu.memory_space<smem>>
    %c7 = arith.constant 7 : index
    %7 = memref.load %arg1[%c7] : memref<48xf32, #tpu.memory_space<smem>>
    %c8 = arith.constant 8 : index
    %8 = memref.load %arg1[%c8] : memref<48xf32, #tpu.memory_space<smem>>
    %c9 = arith.constant 9 : index
    %9 = memref.load %arg1[%c9] : memref<48xf32, #tpu.memory_space<smem>>
    %c10 = arith.constant 10 : index
    %10 = memref.load %arg1[%c10] : memref<48xf32, #tpu.memory_space<smem>>
    %c11 = arith.constant 11 : index
    %11 = memref.load %arg1[%c11] : memref<48xf32, #tpu.memory_space<smem>>
    %c12 = arith.constant 12 : index
    %12 = memref.load %arg1[%c12] : memref<48xf32, #tpu.memory_space<smem>>
    %c13 = arith.constant 13 : index
    %13 = memref.load %arg1[%c13] : memref<48xf32, #tpu.memory_space<smem>>
    %c14 = arith.constant 14 : index
    %14 = memref.load %arg1[%c14] : memref<48xf32, #tpu.memory_space<smem>>
    %c15 = arith.constant 15 : index
    %15 = memref.load %arg1[%c15] : memref<48xf32, #tpu.memory_space<smem>>
    %c16 = arith.constant 16 : index
    %16 = memref.load %arg1[%c16] : memref<48xf32, #tpu.memory_space<smem>>
    %c17 = arith.constant 17 : index
    %17 = memref.load %arg1[%c17] : memref<48xf32, #tpu.memory_space<smem>>
    %c18 = arith.constant 18 : index
    %18 = memref.load %arg1[%c18] : memref<48xf32, #tpu.memory_space<smem>>
    %c19 = arith.constant 19 : index
    %19 = memref.load %arg1[%c19] : memref<48xf32, #tpu.memory_space<smem>>
    %c20 = arith.constant 20 : index
    %20 = memref.load %arg1[%c20] : memref<48xf32, #tpu.memory_space<smem>>
    %c21 = arith.constant 21 : index
    %21 = memref.load %arg1[%c21] : memref<48xf32, #tpu.memory_space<smem>>
    %c22 = arith.constant 22 : index
    %22 = memref.load %arg1[%c22] : memref<48xf32, #tpu.memory_space<smem>>
    %c23 = arith.constant 23 : index
    %23 = memref.load %arg1[%c23] : memref<48xf32, #tpu.memory_space<smem>>
    %c24 = arith.constant 24 : index
    %24 = memref.load %arg1[%c24] : memref<48xf32, #tpu.memory_space<smem>>
    %c25 = arith.constant 25 : index
    %25 = memref.load %arg1[%c25] : memref<48xf32, #tpu.memory_space<smem>>
    %c26 = arith.constant 26 : index
    %26 = memref.load %arg1[%c26] : memref<48xf32, #tpu.memory_space<smem>>
    %c27 = arith.constant 27 : index
    %27 = memref.load %arg1[%c27] : memref<48xf32, #tpu.memory_space<smem>>
    %c28 = arith.constant 28 : index
    %28 = memref.load %arg1[%c28] : memref<48xf32, #tpu.memory_space<smem>>
    %c29 = arith.constant 29 : index
    %29 = memref.load %arg1[%c29] : memref<48xf32, #tpu.memory_space<smem>>
    %c30 = arith.constant 30 : index
    %30 = memref.load %arg1[%c30] : memref<48xf32, #tpu.memory_space<smem>>
    %c31 = arith.constant 31 : index
    %31 = memref.load %arg1[%c31] : memref<48xf32, #tpu.memory_space<smem>>
    %c32 = arith.constant 32 : index
    %32 = memref.load %arg1[%c32] : memref<48xf32, #tpu.memory_space<smem>>
    %c33 = arith.constant 33 : index
    %33 = memref.load %arg1[%c33] : memref<48xf32, #tpu.memory_space<smem>>
    %c34 = arith.constant 34 : index
    %34 = memref.load %arg1[%c34] : memref<48xf32, #tpu.memory_space<smem>>
    %c35 = arith.constant 35 : index
    %35 = memref.load %arg1[%c35] : memref<48xf32, #tpu.memory_space<smem>>
    %c36 = arith.constant 36 : index
    %36 = memref.load %arg1[%c36] : memref<48xf32, #tpu.memory_space<smem>>
    %c37 = arith.constant 37 : index
    %37 = memref.load %arg1[%c37] : memref<48xf32, #tpu.memory_space<smem>>
    %c38 = arith.constant 38 : index
    %38 = memref.load %arg1[%c38] : memref<48xf32, #tpu.memory_space<smem>>
    %c39 = arith.constant 39 : index
    %39 = memref.load %arg1[%c39] : memref<48xf32, #tpu.memory_space<smem>>
    %c40 = arith.constant 40 : index
    %40 = memref.load %arg1[%c40] : memref<48xf32, #tpu.memory_space<smem>>
    %c41 = arith.constant 41 : index
    %41 = memref.load %arg1[%c41] : memref<48xf32, #tpu.memory_space<smem>>
    %c42 = arith.constant 42 : index
    %42 = memref.load %arg1[%c42] : memref<48xf32, #tpu.memory_space<smem>>
    %c43 = arith.constant 43 : index
    %43 = memref.load %arg1[%c43] : memref<48xf32, #tpu.memory_space<smem>>
    %c44 = arith.constant 44 : index
    %44 = memref.load %arg1[%c44] : memref<48xf32, #tpu.memory_space<smem>>
    %c45 = arith.constant 45 : index
    %45 = memref.load %arg1[%c45] : memref<48xf32, #tpu.memory_space<smem>>
    %c46 = arith.constant 46 : index
    %46 = memref.load %arg1[%c46] : memref<48xf32, #tpu.memory_space<smem>>
    %c47 = arith.constant 47 : index
    %47 = memref.load %arg1[%c47] : memref<48xf32, #tpu.memory_space<smem>>
    %c0_0 = arith.constant 0 : index
    %c0_1 = arith.constant 0 : index
    %48 = vector.load %arg2[%c0_0, %c0_1] : memref<8x128xi32, #tpu.memory_space<vmem>>, vector<8x128xi32>
    %cst = arith.constant 0.000000e+00 : f32
    %49 = vector.broadcast %cst : f32 to vector<8x128xf32>
    %cst_2 = arith.constant 0.000000e+00 : f32
    %50 = vector.broadcast %cst_2 : f32 to vector<8x128xf32>
    %cst_3 = arith.constant 0.000000e+00 : f32
    %51 = vector.broadcast %cst_3 : f32 to vector<8x128xf32>
    %cst_4 = arith.constant 0.000000e+00 : f32
    %52 = vector.broadcast %cst_4 : f32 to vector<8x128xf32>
    %cst_5 = arith.constant 0.000000e+00 : f32
    %53 = vector.broadcast %cst_5 : f32 to vector<8x128xf32>
    %cst_6 = arith.constant 0.000000e+00 : f32
    %54 = vector.broadcast %cst_6 : f32 to vector<8x128xf32>
    %c0_i32 = arith.constant 0 : i32
    %55 = vector.broadcast %c0_i32 : i32 to vector<8x128xi32>
    %56 = arith.cmpi eq, %48, %55 : vector<8x128xi32>
    %57 = vector.broadcast %0 : f32 to vector<8x128xf32>
    %58 = arith.select %56, %57, %49 : vector<8x128xi1>, vector<8x128xf32>
    %59 = vector.broadcast %1 : f32 to vector<8x128xf32>
    %60 = arith.select %56, %59, %50 : vector<8x128xi1>, vector<8x128xf32>
    %61 = vector.broadcast %2 : f32 to vector<8x128xf32>
    %62 = arith.select %56, %61, %51 : vector<8x128xi1>, vector<8x128xf32>
    %63 = vector.broadcast %3 : f32 to vector<8x128xf32>
    %64 = arith.select %56, %63, %52 : vector<8x128xi1>, vector<8x128xf32>
    %65 = vector.broadcast %4 : f32 to vector<8x128xf32>
    %66 = arith.select %56, %65, %53 : vector<8x128xi1>, vector<8x128xf32>
    %67 = vector.broadcast %5 : f32 to vector<8x128xf32>
    %68 = arith.select %56, %67, %54 : vector<8x128xi1>, vector<8x128xf32>
    %c1_i32 = arith.constant 1 : i32
    %69 = vector.broadcast %c1_i32 : i32 to vector<8x128xi32>
    %70 = arith.cmpi eq, %48, %69 : vector<8x128xi32>
    %71 = vector.broadcast %6 : f32 to vector<8x128xf32>
    %72 = arith.select %70, %71, %58 : vector<8x128xi1>, vector<8x128xf32>
    %73 = vector.broadcast %7 : f32 to vector<8x128xf32>
    %74 = arith.select %70, %73, %60 : vector<8x128xi1>, vector<8x128xf32>
    %75 = vector.broadcast %8 : f32 to vector<8x128xf32>
    %76 = arith.select %70, %75, %62 : vector<8x128xi1>, vector<8x128xf32>
    %77 = vector.broadcast %9 : f32 to vector<8x128xf32>
    %78 = arith.select %70, %77, %64 : vector<8x128xi1>, vector<8x128xf32>
    %79 = vector.broadcast %10 : f32 to vector<8x128xf32>
    %80 = arith.select %70, %79, %66 : vector<8x128xi1>, vector<8x128xf32>
    %81 = vector.broadcast %11 : f32 to vector<8x128xf32>
    %82 = arith.select %70, %81, %68 : vector<8x128xi1>, vector<8x128xf32>
    %c2_i32 = arith.constant 2 : i32
    %83 = vector.broadcast %c2_i32 : i32 to vector<8x128xi32>
    %84 = arith.cmpi eq, %48, %83 : vector<8x128xi32>
    %85 = vector.broadcast %12 : f32 to vector<8x128xf32>
    %86 = arith.select %84, %85, %72 : vector<8x128xi1>, vector<8x128xf32>
    %87 = vector.broadcast %13 : f32 to vector<8x128xf32>
    %88 = arith.select %84, %87, %74 : vector<8x128xi1>, vector<8x128xf32>
    %89 = vector.broadcast %14 : f32 to vector<8x128xf32>
    %90 = arith.select %84, %89, %76 : vector<8x128xi1>, vector<8x128xf32>
    %91 = vector.broadcast %15 : f32 to vector<8x128xf32>
    %92 = arith.select %84, %91, %78 : vector<8x128xi1>, vector<8x128xf32>
    %93 = vector.broadcast %16 : f32 to vector<8x128xf32>
    %94 = arith.select %84, %93, %80 : vector<8x128xi1>, vector<8x128xf32>
    %95 = vector.broadcast %17 : f32 to vector<8x128xf32>
    %96 = arith.select %84, %95, %82 : vector<8x128xi1>, vector<8x128xf32>
    %c3_i32 = arith.constant 3 : i32
    %97 = vector.broadcast %c3_i32 : i32 to vector<8x128xi32>
    %98 = arith.cmpi eq, %48, %97 : vector<8x128xi32>
    %99 = vector.broadcast %18 : f32 to vector<8x128xf32>
    %100 = arith.select %98, %99, %86 : vector<8x128xi1>, vector<8x128xf32>
    %101 = vector.broadcast %19 : f32 to vector<8x128xf32>
    %102 = arith.select %98, %101, %88 : vector<8x128xi1>, vector<8x128xf32>
    %103 = vector.broadcast %20 : f32 to vector<8x128xf32>
    %104 = arith.select %98, %103, %90 : vector<8x128xi1>, vector<8x128xf32>
    %105 = vector.broadcast %21 : f32 to vector<8x128xf32>
    %106 = arith.select %98, %105, %92 : vector<8x128xi1>, vector<8x128xf32>
    %107 = vector.broadcast %22 : f32 to vector<8x128xf32>
    %108 = arith.select %98, %107, %94 : vector<8x128xi1>, vector<8x128xf32>
    %109 = vector.broadcast %23 : f32 to vector<8x128xf32>
    %110 = arith.select %98, %109, %96 : vector<8x128xi1>, vector<8x128xf32>
    %c4_i32 = arith.constant 4 : i32
    %111 = vector.broadcast %c4_i32 : i32 to vector<8x128xi32>
    %112 = arith.cmpi eq, %48, %111 : vector<8x128xi32>
    %113 = vector.broadcast %24 : f32 to vector<8x128xf32>
    %114 = arith.select %112, %113, %100 : vector<8x128xi1>, vector<8x128xf32>
    %115 = vector.broadcast %25 : f32 to vector<8x128xf32>
    %116 = arith.select %112, %115, %102 : vector<8x128xi1>, vector<8x128xf32>
    %117 = vector.broadcast %26 : f32 to vector<8x128xf32>
    %118 = arith.select %112, %117, %104 : vector<8x128xi1>, vector<8x128xf32>
    %119 = vector.broadcast %27 : f32 to vector<8x128xf32>
    %120 = arith.select %112, %119, %106 : vector<8x128xi1>, vector<8x128xf32>
    %121 = vector.broadcast %28 : f32 to vector<8x128xf32>
    %122 = arith.select %112, %121, %108 : vector<8x128xi1>, vector<8x128xf32>
    %123 = vector.broadcast %29 : f32 to vector<8x128xf32>
    %124 = arith.select %112, %123, %110 : vector<8x128xi1>, vector<8x128xf32>
    %c5_i32 = arith.constant 5 : i32
    %125 = vector.broadcast %c5_i32 : i32 to vector<8x128xi32>
    %126 = arith.cmpi eq, %48, %125 : vector<8x128xi32>
    %127 = vector.broadcast %30 : f32 to vector<8x128xf32>
    %128 = arith.select %126, %127, %114 : vector<8x128xi1>, vector<8x128xf32>
    %129 = vector.broadcast %31 : f32 to vector<8x128xf32>
    %130 = arith.select %126, %129, %116 : vector<8x128xi1>, vector<8x128xf32>
    %131 = vector.broadcast %32 : f32 to vector<8x128xf32>
    %132 = arith.select %126, %131, %118 : vector<8x128xi1>, vector<8x128xf32>
    %133 = vector.broadcast %33 : f32 to vector<8x128xf32>
    %134 = arith.select %126, %133, %120 : vector<8x128xi1>, vector<8x128xf32>
    %135 = vector.broadcast %34 : f32 to vector<8x128xf32>
    %136 = arith.select %126, %135, %122 : vector<8x128xi1>, vector<8x128xf32>
    %137 = vector.broadcast %35 : f32 to vector<8x128xf32>
    %138 = arith.select %126, %137, %124 : vector<8x128xi1>, vector<8x128xf32>
    %c6_i32 = arith.constant 6 : i32
    %139 = vector.broadcast %c6_i32 : i32 to vector<8x128xi32>
    %140 = arith.cmpi eq, %48, %139 : vector<8x128xi32>
    %141 = vector.broadcast %36 : f32 to vector<8x128xf32>
    %142 = arith.select %140, %141, %128 : vector<8x128xi1>, vector<8x128xf32>
    %143 = vector.broadcast %37 : f32 to vector<8x128xf32>
    %144 = arith.select %140, %143, %130 : vector<8x128xi1>, vector<8x128xf32>
    %145 = vector.broadcast %38 : f32 to vector<8x128xf32>
    %146 = arith.select %140, %145, %132 : vector<8x128xi1>, vector<8x128xf32>
    %147 = vector.broadcast %39 : f32 to vector<8x128xf32>
    %148 = arith.select %140, %147, %134 : vector<8x128xi1>, vector<8x128xf32>
    %149 = vector.broadcast %40 : f32 to vector<8x128xf32>
    %150 = arith.select %140, %149, %136 : vector<8x128xi1>, vector<8x128xf32>
    %151 = vector.broadcast %41 : f32 to vector<8x128xf32>
    %152 = arith.select %140, %151, %138 : vector<8x128xi1>, vector<8x128xf32>
    %c7_i32 = arith.constant 7 : i32
    %153 = vector.broadcast %c7_i32 : i32 to vector<8x128xi32>
    %154 = arith.cmpi eq, %48, %153 : vector<8x128xi32>
    %155 = vector.broadcast %42 : f32 to vector<8x128xf32>
    %156 = arith.select %154, %155, %142 : vector<8x128xi1>, vector<8x128xf32>
    %157 = vector.broadcast %43 : f32 to vector<8x128xf32>
    %158 = arith.select %154, %157, %144 : vector<8x128xi1>, vector<8x128xf32>
    %159 = vector.broadcast %44 : f32 to vector<8x128xf32>
    %160 = arith.select %154, %159, %146 : vector<8x128xi1>, vector<8x128xf32>
    %161 = vector.broadcast %45 : f32 to vector<8x128xf32>
    %162 = arith.select %154, %161, %148 : vector<8x128xi1>, vector<8x128xf32>
    %163 = vector.broadcast %46 : f32 to vector<8x128xf32>
    %164 = arith.select %154, %163, %150 : vector<8x128xi1>, vector<8x128xf32>
    %165 = vector.broadcast %47 : f32 to vector<8x128xf32>
    %166 = arith.select %154, %165, %152 : vector<8x128xi1>, vector<8x128xf32>
    %167 = arith.mulf %162, %162 : vector<8x128xf32>
    %168 = arith.mulf %164, %164 : vector<8x128xf32>
    %169 = arith.addf %167, %168 : vector<8x128xf32>
    %170 = arith.mulf %166, %166 : vector<8x128xf32>
    %171 = arith.addf %169, %170 : vector<8x128xf32>
    %172 = math.sqrt %171 : vector<8x128xf32>
    %cst_7 = arith.constant 0.00999999977 : f32
    %173 = vector.broadcast %cst_7 : f32 to vector<8x128xf32>
    %174 = arith.cmpf olt, %172, %173 : vector<8x128xf32>
    %cst_8 = arith.constant 1.000000e+00 : f32
    %175 = vector.broadcast %cst_8 : f32 to vector<8x128xf32>
    %176 = arith.select %174, %175, %172 : vector<8x128xi1>, vector<8x128xf32>
    %cst_9 = arith.constant 1.000000e+00 : f32
    %177 = vector.broadcast %cst_9 : f32 to vector<8x128xf32>
    %178 = arith.select %174, %177, %171 : vector<8x128xi1>, vector<8x128xf32>
    %cst_10 = arith.constant 4.000000e+00 : f32
    %179 = vector.broadcast %cst_10 : f32 to vector<8x128xf32>
    %180 = arith.addf %179, %171 : vector<8x128xf32>
    %cst_11 = arith.constant 8.000000e+00 : f32
    %181 = vector.broadcast %cst_11 : f32 to vector<8x128xf32>
    %182 = arith.divf %181, %180 : vector<8x128xf32>
    %cst_12 = arith.constant 1.000000e+00 : f32
    %183 = vector.broadcast %cst_12 : f32 to vector<8x128xf32>
    %184 = arith.subf %182, %183 : vector<8x128xf32>
    %185 = math.cos %172 : vector<8x128xf32>
    %186 = arith.select %174, %184, %185 : vector<8x128xi1>, vector<8x128xf32>
    %187 = math.sin %172 : vector<8x128xf32>
    %cst_13 = arith.constant 5.000000e-01 : f32
    %188 = vector.broadcast %cst_13 : f32 to vector<8x128xf32>
    %189 = arith.mulf %188, %186 : vector<8x128xf32>
    %cst_14 = arith.constant 5.000000e-01 : f32
    %190 = vector.broadcast %cst_14 : f32 to vector<8x128xf32>
    %191 = arith.addf %189, %190 : vector<8x128xf32>
    %192 = arith.divf %187, %176 : vector<8x128xf32>
    %193 = arith.select %174, %191, %192 : vector<8x128xi1>, vector<8x128xf32>
    %cst_15 = arith.constant 5.000000e-01 : f32
    %194 = vector.broadcast %cst_15 : f32 to vector<8x128xf32>
    %195 = arith.mulf %194, %193 : vector<8x128xf32>
    %cst_16 = arith.constant 1.000000e+00 : f32
    %196 = vector.broadcast %cst_16 : f32 to vector<8x128xf32>
    %197 = arith.subf %196, %186 : vector<8x128xf32>
    %198 = arith.divf %197, %178 : vector<8x128xf32>
    %199 = arith.select %174, %195, %198 : vector<8x128xi1>, vector<8x128xf32>
    %200 = arith.mulf %199, %162 : vector<8x128xf32>
    %201 = arith.mulf %200, %162 : vector<8x128xf32>
    %202 = arith.addf %201, %186 : vector<8x128xf32>
    %203 = arith.mulf %199, %164 : vector<8x128xf32>
    %204 = arith.mulf %203, %164 : vector<8x128xf32>
    %205 = arith.addf %204, %186 : vector<8x128xf32>
    %206 = arith.mulf %199, %166 : vector<8x128xf32>
    %207 = arith.mulf %206, %166 : vector<8x128xf32>
    %208 = arith.addf %207, %186 : vector<8x128xf32>
    %209 = arith.mulf %199, %162 : vector<8x128xf32>
    %210 = arith.mulf %209, %164 : vector<8x128xf32>
    %211 = arith.mulf %193, %166 : vector<8x128xf32>
    %212 = arith.subf %210, %211 : vector<8x128xf32>
    %213 = arith.mulf %199, %164 : vector<8x128xf32>
    %214 = arith.mulf %213, %162 : vector<8x128xf32>
    %215 = arith.mulf %193, %166 : vector<8x128xf32>
    %216 = arith.addf %214, %215 : vector<8x128xf32>
    %217 = arith.mulf %199, %162 : vector<8x128xf32>
    %218 = arith.mulf %217, %166 : vector<8x128xf32>
    %219 = arith.mulf %193, %164 : vector<8x128xf32>
    %220 = arith.addf %218, %219 : vector<8x128xf32>
    %221 = arith.mulf %199, %166 : vector<8x128xf32>
    %222 = arith.mulf %221, %162 : vector<8x128xf32>
    %223 = arith.mulf %193, %164 : vector<8x128xf32>
    %224 = arith.subf %222, %223 : vector<8x128xf32>
    %225 = arith.mulf %199, %164 : vector<8x128xf32>
    %226 = arith.mulf %225, %166 : vector<8x128xf32>
    %227 = arith.mulf %193, %162 : vector<8x128xf32>
    %228 = arith.subf %226, %227 : vector<8x128xf32>
    %229 = arith.mulf %199, %166 : vector<8x128xf32>
    %230 = arith.mulf %229, %164 : vector<8x128xf32>
    %231 = arith.mulf %193, %162 : vector<8x128xf32>
    %232 = arith.addf %230, %231 : vector<8x128xf32>
    %c0_17 = arith.constant 0 : index
    %c0_18 = arith.constant 0 : index
    %c0_19 = arith.constant 0 : index
    %233 = vector.load %arg3[%c0_17, %c0_18, %c0_19] : memref<3x8x128xf32, #tpu.memory_space<vmem>>, vector<1x8x128xf32>
    %234 = vector.shape_cast %233 : vector<1x8x128xf32> to vector<8x128xf32>
    %c1_20 = arith.constant 1 : index
    %c0_21 = arith.constant 0 : index
    %c0_22 = arith.constant 0 : index
    %235 = vector.load %arg3[%c1_20, %c0_21, %c0_22] : memref<3x8x128xf32, #tpu.memory_space<vmem>>, vector<1x8x128xf32>
    %236 = vector.shape_cast %235 : vector<1x8x128xf32> to vector<8x128xf32>
    %c2_23 = arith.constant 2 : index
    %c0_24 = arith.constant 0 : index
    %c0_25 = arith.constant 0 : index
    %237 = vector.load %arg3[%c2_23, %c0_24, %c0_25] : memref<3x8x128xf32, #tpu.memory_space<vmem>>, vector<1x8x128xf32>
    %238 = vector.shape_cast %237 : vector<1x8x128xf32> to vector<8x128xf32>
    %c0_26 = arith.constant 0 : index
    %c0_27 = arith.constant 0 : index
    %c0_28 = arith.constant 0 : index
    %239 = vector.load %arg4[%c0_26, %c0_27, %c0_28] : memref<3x8x128xf32, #tpu.memory_space<vmem>>, vector<1x8x128xf32>
    %240 = vector.shape_cast %239 : vector<1x8x128xf32> to vector<8x128xf32>
    %c1_29 = arith.constant 1 : index
    %c0_30 = arith.constant 0 : index
    %c0_31 = arith.constant 0 : index
    %241 = vector.load %arg4[%c1_29, %c0_30, %c0_31] : memref<3x8x128xf32, #tpu.memory_space<vmem>>, vector<1x8x128xf32>
    %242 = vector.shape_cast %241 : vector<1x8x128xf32> to vector<8x128xf32>
    %c2_32 = arith.constant 2 : index
    %c0_33 = arith.constant 0 : index
    %c0_34 = arith.constant 0 : index
    %243 = vector.load %arg4[%c2_32, %c0_33, %c0_34] : memref<3x8x128xf32, #tpu.memory_space<vmem>>, vector<1x8x128xf32>
    %244 = vector.shape_cast %243 : vector<1x8x128xf32> to vector<8x128xf32>
    %245 = arith.addf %234, %156 : vector<8x128xf32>
    %c0_35 = arith.constant 0 : index
    %c0_36 = arith.constant 0 : index
    %c0_37 = arith.constant 0 : index
    %246 = vector.load %arg5[%c0_35, %c0_36, %c0_37] : memref<3x8x128xf32, #tpu.memory_space<vmem>>, vector<1x8x128xf32>
    %247 = vector.shape_cast %246 : vector<1x8x128xf32> to vector<8x128xf32>
    %248 = vector.shape_cast %245 : vector<8x128xf32> to vector<1x8x128xf32>
    tpu.vector_store %arg5[%c0_35, %c0_36, %c0_37], %248 {strides = array<i32>} : memref<3x8x128xf32, #tpu.memory_space<vmem>>, vector<1x8x128xf32>,
    %249 = arith.addf %236, %158 : vector<8x128xf32>
    %c1_38 = arith.constant 1 : index
    %c0_39 = arith.constant 0 : index
    %c0_40 = arith.constant 0 : index
    %250 = vector.load %arg5[%c1_38, %c0_39, %c0_40] : memref<3x8x128xf32, #tpu.memory_space<vmem>>, vector<1x8x128xf32>
    %251 = vector.shape_cast %250 : vector<1x8x128xf32> to vector<8x128xf32>
    %252 = vector.shape_cast %249 : vector<8x128xf32> to vector<1x8x128xf32>
    tpu.vector_store %arg5[%c1_38, %c0_39, %c0_40], %252 {strides = array<i32>} : memref<3x8x128xf32, #tpu.memory_space<vmem>>, vector<1x8x128xf32>,
    %253 = arith.addf %238, %160 : vector<8x128xf32>
    %c2_41 = arith.constant 2 : index
    %c0_42 = arith.constant 0 : index
    %c0_43 = arith.constant 0 : index
    %254 = vector.load %arg5[%c2_41, %c0_42, %c0_43] : memref<3x8x128xf32, #tpu.memory_space<vmem>>, vector<1x8x128xf32>
    %255 = vector.shape_cast %254 : vector<1x8x128xf32> to vector<8x128xf32>
    %256 = vector.shape_cast %253 : vector<8x128xf32> to vector<1x8x128xf32>
    tpu.vector_store %arg5[%c2_41, %c0_42, %c0_43], %256 {strides = array<i32>} : memref<3x8x128xf32, #tpu.memory_space<vmem>>, vector<1x8x128xf32>,
    %257 = arith.mulf %202, %240 : vector<8x128xf32>
    %258 = arith.mulf %212, %242 : vector<8x128xf32>
    %259 = arith.addf %257, %258 : vector<8x128xf32>
    %260 = arith.mulf %220, %244 : vector<8x128xf32>
    %261 = arith.addf %259, %260 : vector<8x128xf32>
    %c0_44 = arith.constant 0 : index
    %c0_45 = arith.constant 0 : index
    %c0_46 = arith.constant 0 : index
    %262 = vector.load %arg6[%c0_44, %c0_45, %c0_46] : memref<3x8x128xf32, #tpu.memory_space<vmem>>, vector<1x8x128xf32>
    %263 = vector.shape_cast %262 : vector<1x8x128xf32> to vector<8x128xf32>
    %264 = vector.shape_cast %261 : vector<8x128xf32> to vector<1x8x128xf32>
    tpu.vector_store %arg6[%c0_44, %c0_45, %c0_46], %264 {strides = array<i32>} : memref<3x8x128xf32, #tpu.memory_space<vmem>>, vector<1x8x128xf32>,
    %265 = arith.mulf %216, %240 : vector<8x128xf32>
    %266 = arith.mulf %205, %242 : vector<8x128xf32>
    %267 = arith.addf %265, %266 : vector<8x128xf32>
    %268 = arith.mulf %228, %244 : vector<8x128xf32>
    %269 = arith.addf %267, %268 : vector<8x128xf32>
    %c1_47 = arith.constant 1 : index
    %c0_48 = arith.constant 0 : index
    %c0_49 = arith.constant 0 : index
    %270 = vector.load %arg6[%c1_47, %c0_48, %c0_49] : memref<3x8x128xf32, #tpu.memory_space<vmem>>, vector<1x8x128xf32>
    %271 = vector.shape_cast %270 : vector<1x8x128xf32> to vector<8x128xf32>
    %272 = vector.shape_cast %269 : vector<8x128xf32> to vector<1x8x128xf32>
    tpu.vector_store %arg6[%c1_47, %c0_48, %c0_49], %272 {strides = array<i32>} : memref<3x8x128xf32, #tpu.memory_space<vmem>>, vector<1x8x128xf32>,
    %273 = arith.mulf %224, %240 : vector<8x128xf32>
    %274 = arith.mulf %232, %242 : vector<8x128xf32>
    %275 = arith.addf %273, %274 : vector<8x128xf32>
    %276 = arith.mulf %208, %244 : vector<8x128xf32>
    %277 = arith.addf %275, %276 : vector<8x128xf32>
    %c2_50 = arith.constant 2 : index
    %c0_51 = arith.constant 0 : index
    %c0_52 = arith.constant 0 : index
    %278 = vector.load %arg6[%c2_50, %c0_51, %c0_52] : memref<3x8x128xf32, #tpu.memory_space<vmem>>, vector<1x8x128xf32>
    %279 = vector.shape_cast %278 : vector<1x8x128xf32> to vector<8x128xf32>
    %280 = vector.shape_cast %277 : vector<8x128xf32> to vector<1x8x128xf32>
    tpu.vector_store %arg6[%c2_50, %c0_51, %c0_52], %280 {strides = array<i32>} : memref<3x8x128xf32, #tpu.memory_space<vmem>>, vector<1x8x128xf32>,
    return
  }
  func.func @transform_0(%arg0: i32) -> i32 {
    %c0_i32 = arith.constant 0 : i32
    %c0_i32_0 = arith.constant 0 : i32
    return %c0_i32 : i32
  }
  func.func @transform_1(%arg0: i32) -> (i32, i32) {
    %c0_i32 = arith.constant 0 : i32
    %c0_i32_0 = arith.constant 0 : i32
    return %arg0, %c0_i32 : i32, i32
  }
  func.func @transform_2(%arg0: i32) -> (i32, i32, i32) {
    %c0_i32 = arith.constant 0 : i32
    %c0_i32_0 = arith.constant 0 : i32
    %c0_i32_1 = arith.constant 0 : i32
    return %c0_i32, %arg0, %c0_i32_0 : i32, i32, i32
  }
  func.func @transform_3(%arg0: i32) -> (i32, i32, i32) {
    %c0_i32 = arith.constant 0 : i32
    %c0_i32_0 = arith.constant 0 : i32
    %c0_i32_1 = arith.constant 0 : i32
    return %c0_i32, %arg0, %c0_i32_0 : i32, i32, i32
  }
  func.func @transform_4(%arg0: i32) -> (i32, i32, i32) {
    %c0_i32 = arith.constant 0 : i32
    %c0_i32_0 = arith.constant 0 : i32
    %c0_i32_1 = arith.constant 0 : i32
    return %c0_i32, %arg0, %c0_i32_0 : i32, i32, i32
  }
  func.func @transform_5(%arg0: i32) -> (i32, i32, i32) {
    %c0_i32 = arith.constant 0 : i32
    %c0_i32_0 = arith.constant 0 : i32
    %c0_i32_1 = arith.constant 0 : i32
    return %c0_i32, %arg0, %c0_i32_0 : i32, i32, i32
  }
}

</mosaic_0001>

<llo_original>
// kernel: apply_pose_correction.1
$region0: #{apply_pose_correction.1}
  #allocation0 [shape = 'u32[]', space=smem, size = 0x4, offset = 0x4, fixed_abs, tag = 'smem constant byte address 0x4 - core index']
  #allocation1 [shape = 'u32[144,128]{1,0:T(1,128)}', space=vmem, size = 0x12000, scoped, tag = 'internal scratch']
  %s0 = inlined_call_operand.vmem [shape: f32[48], index: 0, kind: input, shape index: {}]
  %s1 = inlined_call_operand.vmem [shape: s32[8,128], index: 1, kind: input, shape index: {}]
  %s2 = inlined_call_operand.vmem [shape: f32[3,8,128], index: 2, kind: input, shape index: {}]
  %s3 = inlined_call_operand.vmem [shape: f32[3,8,128], index: 3, kind: input, shape index: {}]
  %s4 = inlined_call_operand.vmem [shape: f32[3,8,128], index: 4, kind: output, shape index: {0}]
  %s5 = inlined_call_operand.vmem [shape: f32[3,8,128], index: 5, kind: output, shape index: {1}]
  %6 = xla_tuple %s4, %s5
  %s7 = sld [smem:[#allocation0]]
  $region38: #{apply_pose_correction.1} parent=0
    _
  %s9 = ssub.s32 1, %s7
  %s10 = scalar_select 0, %s9, %s7
  $region1: #{apply_pose_correction.1} parent=0
    #allocation2 [shape = 'u8[512]{0}', space=smem, size = 0x200, scoped, tag = 'input window, operand 0, single buffered']
    #allocation3 [shape = 's32[1]{0}', space=sflag, size = 0x4, scoped, tag = 'scoped memory for apply_pose_correction.1']
    %11 = vsyncpa [#allocation3], 0
    // Predicated region
    $region2: #{apply_pose_correction.1} parent=1 // pred_check
      _
    $region3: #{apply_pose_correction.1} parent=1 // pred_check_branch
      %13 = sbr.rel (0) target = $region5
    $region4: #{apply_pose_correction.1} parent=1 // pred_region
      %s15 = ssub.s32 16, 16
      %16 = vsyncadd [#allocation3], %s15
      %s18 = sshll.u32 %s0, 4
      %s19 = int_to_ptr.vmem [resolvable:$true] %s18
      %21 = dma.vmem_to_smem %s19, 16, [#allocation2], [#allocation3]
    $region5: #{apply_pose_correction.1} parent=1 // pred_fallthru
      _
    // Predicated region
    $region6: #{apply_pose_correction.1} parent=1 // pred_check
      _
    $region7: #{apply_pose_correction.1} parent=1 // pred_check_branch
      %23 = sbr.rel (0) target = $region9
    $region8: #{apply_pose_correction.1} parent=1 // pred_region
      _
    $region9: #{apply_pose_correction.1} parent=1 // pred_fallthru
      _
    // Predicated region
    $region10: #{apply_pose_correction.1} parent=1 // pred_check
      _
    $region11: #{apply_pose_correction.1} parent=1 // pred_check_branch
      %25 = sbr.rel (0) target = $region13
    $region12: #{apply_pose_correction.1} parent=1 // pred_region
      _
    $region13: #{apply_pose_correction.1} parent=1 // pred_fallthru
      _
    // Predicated region
    $region14: #{apply_pose_correction.1} parent=1 // pred_check
      _
    $region15: #{apply_pose_correction.1} parent=1 // pred_check_branch
      %27 = sbr.rel (0) target = $region17
    $region16: #{apply_pose_correction.1} parent=1 // pred_region
      _
    $region17: #{apply_pose_correction.1} parent=1 // pred_fallthru
      _
    // Predicated region
    $region18: #{apply_pose_correction.1} parent=1 // pred_check
      _
    $region19: #{apply_pose_correction.1} parent=1 // pred_check_branch
      %29 = sbr.rel (0) target = $region21
    $region20: #{apply_pose_correction.1} parent=1 // pred_region
      %30 = dma.done [#allocation3], 16
    $region21: #{apply_pose_correction.1} parent=1 // pred_fallthru
      _
    %31 = sfence
    %s32 = sld [smem:[#allocation2]]
    %s33 = sld [smem:[#allocation2 + $0x1]]
    %s34 = sld [smem:[#allocation2 + $0x2]]
    %s35 = sld [smem:[#allocation2 + $0x3]]
    %s36 = sld [smem:[#allocation2 + $0x4]]
    %s37 = sld [smem:[#allocation2 + $0x5]]
    %s38 = sld [smem:[#allocation2 + $0x6]]
    %s39 = sld [smem:[#allocation2 + $0x7]]
    %s40 = sld [smem:[#allocation2 + $0x8]]
    %s41 = sld [smem:[#allocation2 + $0x9]]
    %s42 = sld [smem:[#allocation2 + $0xa]]
    %s43 = sld [smem:[#allocation2 + $0xb]]
    %s44 = sld [smem:[#allocation2 + $0xc]]
    %s45 = sld [smem:[#allocation2 + $0xd]]
    %s46 = sld [smem:[#allocation2 + $0xe]]
    %s47 = sld [smem:[#allocation2 + $0xf]]
    %s48 = sld [smem:[#allocation2 + $0x10]]
    %s49 = sld [smem:[#allocation2 + $0x11]]
    %s50 = sld [smem:[#allocation2 + $0x12]]
    %s51 = sld [smem:[#allocation2 + $0x13]]
    %s52 = sld [smem:[#allocation2 + $0x14]]
    %s53 = sld [smem:[#allocation2 + $0x15]]
    %s54 = sld [smem:[#allocation2 + $0x16]]
    %s55 = sld [smem:[#allocation2 + $0x17]]
    %s56 = sld [smem:[#allocation2 + $0x18]]
    %s57 = sld [smem:[#allocation2 + $0x19]]
    %s58 = sld [smem:[#allocation2 + $0x1a]]
    %s59 = sld [smem:[#allocation2 + $0x1b]]
    %s60 = sld [smem:[#allocation2 + $0x1c]]
    %s61 = sld [smem:[#allocation2 + $0x1d]]
    %s62 = sld [smem:[#allocation2 + $0x1e]]
    %s63 = sld [smem:[#allocation2 + $0x1f]]
    %s64 = sld [smem:[#allocation2 + $0x20]]
    %s65 = sld [smem:[#allocation2 + $0x21]]
    %s66 = sld [smem:[#allocation2 + $0x22]]
    %s67 = sld [smem:[#allocation2 + $0x23]]
    %s68 = sld [smem:[#allocation2 + $0x24]]
    %s69 = sld [smem:[#allocation2 + $0x25]]
    %s70 = sld [smem:[#allocation2 + $0x26]]
    %s71 = sld [smem:[#allocation2 + $0x27]]
    %s72 = sld [smem:[#allocation2 + $0x28]]
    %s73 = sld [smem:[#allocation2 + $0x29]]
    %s74 = sld [smem:[#allocation2 + $0x2a]]
    %s75 = sld [smem:[#allocation2 + $0x2b]]
    %s76 = sld [smem:[#allocation2 + $0x2c]]
    %s77 = sld [smem:[#allocation2 + $0x2d]]
    %s78 = sld [smem:[#allocation2 + $0x2e]]
    %s79 = sld [smem:[#allocation2 + $0x2f]]
    %v80 = vld [vmem:[%s1] sm:$0xff]
    %vm81 = vcmp.eq.s32.totalorder %v80, 0
    %v82 = vstv %s32
    %v83 = vsel %vm81, %v82, 0.0
    %v84 = vstv %s33
    %v85 = vsel %vm81, %v84, 0.0
    %v86 = vstv %s34
    %v87 = vsel %vm81, %v86, 0.0
    %v88 = vstv %s35
    %v89 = vsel %vm81, %v88, 0.0
    %v90 = vstv %s36
    %v91 = vsel %vm81, %v90, 0.0
    %v92 = vstv %s37
    %v93 = vsel %vm81, %v92, 0.0
    %vm94 = vcmp.eq.s32.totalorder %v80, 1
    %v95 = vstv %s38
    %v96 = vsel %vm94, %v95, %v83
    %v97 = vstv %s39
    %v98 = vsel %vm94, %v97, %v85
    %v99 = vstv %s40
    %v100 = vsel %vm94, %v99, %v87
    %v101 = vstv %s41
    %v102 = vsel %vm94, %v101, %v89
    %v103 = vstv %s42
    %v104 = vsel %vm94, %v103, %v91
    %v105 = vstv %s43
    %v106 = vsel %vm94, %v105, %v93
    %vm107 = vcmp.eq.s32.totalorder %v80, 2
    %v108 = vstv %s44
    %v109 = vsel %vm107, %v108, %v96
    %v110 = vstv %s45
    %v111 = vsel %vm107, %v110, %v98
    %v112 = vstv %s46
    %v113 = vsel %vm107, %v112, %v100
    %v114 = vstv %s47
    %v115 = vsel %vm107, %v114, %v102
    %v116 = vstv %s48
    %v117 = vsel %vm107, %v116, %v104
    %v118 = vstv %s49
    %v119 = vsel %vm107, %v118, %v106
    %vm120 = vcmp.eq.s32.totalorder %v80, 3
    %v121 = vstv %s50
    %v122 = vsel %vm120, %v121, %v109
    %v123 = vstv %s51
    %v124 = vsel %vm120, %v123, %v111
    %v125 = vstv %s52
    %v126 = vsel %vm120, %v125, %v113
    %v127 = vstv %s53
    %v128 = vsel %vm120, %v127, %v115
    %v129 = vstv %s54
    %v130 = vsel %vm120, %v129, %v117
    %v131 = vstv %s55
    %v132 = vsel %vm120, %v131, %v119
    %vm133 = vcmp.eq.s32.totalorder %v80, 4
    %v134 = vstv %s56
    %v135 = vsel %vm133, %v134, %v122
    %v136 = vstv %s57
    %v137 = vsel %vm133, %v136, %v124
    %v138 = vstv %s58
    %v139 = vsel %vm133, %v138, %v126
    %v140 = vstv %s59
    %v141 = vsel %vm133, %v140, %v128
    %v142 = vstv %s60
    %v143 = vsel %vm133, %v142, %v130
    %v144 = vstv %s61
    %v145 = vsel %vm133, %v144, %v132
    %vm146 = vcmp.eq.s32.totalorder %v80, 5
    %v147 = vstv %s62
    %v148 = vsel %vm146, %v147, %v135
    %v149 = vstv %s63
    %v150 = vsel %vm146, %v149, %v137
    %v151 = vstv %s64
    %v152 = vsel %vm146, %v151, %v139
    %v153 = vstv %s65
    %v154 = vsel %vm146, %v153, %v141
    %v155 = vstv %s66
    %v156 = vsel %vm146, %v155, %v143
    %v157 = vstv %s67
    %v158 = vsel %vm146, %v157, %v145
    %vm159 = vcmp.eq.s32.totalorder %v80, 6
    %v160 = vstv %s68
    %v161 = vsel %vm159, %v160, %v148
    %v162 = vstv %s69
    %v163 = vsel %vm159, %v162, %v150
    %v164 = vstv %s70
    %v165 = vsel %vm159, %v164, %v152
    %v166 = vstv %s71
    %v167 = vsel %vm159, %v166, %v154
    %v168 = vstv %s72
    %v169 = vsel %vm159, %v168, %v156
    %v170 = vstv %s73
    %v171 = vsel %vm159, %v170, %v158
    %vm172 = vcmp.eq.s32.totalorder %v80, 7
    %v173 = vstv %s74
    %v174 = vsel %vm172, %v173, %v161
    %v175 = vstv %s75
    %v176 = vsel %vm172, %v175, %v163
    %v177 = vstv %s76
    %v178 = vsel %vm172, %v177, %v165
    %v179 = vstv %s77
    %v180 = vsel %vm172, %v179, %v167
    %v181 = vstv %s78
    %v182 = vsel %vm172, %v181, %v169
    %v183 = vstv %s79
    %v184 = vsel %vm172, %v183, %v171
    %v185 = vmul.f32 %v180, %v180
    %v186 = vmul.f32 %v182, %v182
    %v187 = vadd.f32 %v185, %v186
    %v188 = vmul.f32 %v184, %v184
    %v189 = vadd.f32 %v187, %v188
    %v190 = vrsqrt.pop %v189
    %v191 = vmul.f32 %v189, %v190
    %vm192 = vcmp.eq.f32.partialorder %v189, inf
    %v193 = vsel %vm192, %v189, %v191
    %vm194 = vcmp.eq.f32.partialorder %v189, 0.0
    %v195 = vand.u32 %v189, 2147483648
    %v196 = vsel %vm194, %v195, %v193
    %vm197 = vcmp.lt.f32.partialorder %v196, 0.01
    %v198 = vsel %vm197, 1.0, %v196
    %v199 = vsel %vm197, 1.0, %v189
    %v200 = vadd.f32 %v189, 4.0
    %v201 = vrcp.pop %v200
    %v202 = vmul.f32 8.0, %v201
    %v203 = vsub.f32 %v202, 1.0
    %v204 = vand.u32 2147483647, %v196
    %vm205 = vcmp.le.f32.partialorder %v204, 0.7853982
    %vm206 = vcmp.lt.s32.totalorder %v196, 0
    %v207 = vand.u32 %v196, 2139095040
    %v208 = vshrl.u32 %v207, 23
    %v209 = vsub.s32 %v208, 127
    %v210 = vand.u32 2147483647, %v196
    %v211 = vand.u32 %v210, 8388607
    %v212 = vor.u32 %v211, 8388608
    %v213 = vsub.s32 0, %v212
    %v214 = vadd.s32 %v209, 1
    %vm215 = vcmp.gt.s32.totalorder %v214, 0
    %v216 = vsel %vm215, %v214, 0
    %v217 = vshrl.u32 %v216, 5
    %v218 = vand.u32 %v216, 31
    %v219 = vsub.s32 32, %v218
    %v220 = vshrl.u32 683565275, %v219
    %v221 = vshll.u32 683565275, %v218
    %v222 = vshrl.u32 2475754826, %v219
    %v223 = vor.u32 %v221, %v222
    %v224 = vshll.u32 2475754826, %v218
    %v225 = vshrl.u32 2131351028, %v219
    %v226 = vor.u32 %v224, %v225
    %v227 = vshll.u32 2131351028, %v218
    %v228 = vshrl.u32 2102212464, %v219
    %v229 = vor.u32 %v227, %v228
    %v230 = vshll.u32 2102212464, %v218
    %v231 = vshrl.u32 920167782, %v219
    %v232 = vor.u32 %v230, %v231
    %v233 = vshll.u32 920167782, %v218
    %v234 = vshrl.u32 1326507024, %v219
    %v235 = vor.u32 %v233, %v234
    %vm236 = vcmp.lt.s32.totalorder %v217, 1
    %vm237 = vcmp.lt.s32.totalorder %v217, 2
    %vm238 = vcmp.lt.s32.totalorder %v217, 3
    %vm239 = vcmp.lt.s32.totalorder %v217, 4
    %v240 = vsel %vm236, %v220, %v223
    %v241 = vsel %vm239, %v229, 2102212464
    %v242 = vsel %vm238, %v226, %v241
    %v243 = vsel %vm237, %v240, %v242
    %v244 = vsel %vm236, %v223, %v226
    %v245 = vsel %vm239, %v232, 920167782
    %v246 = vsel %vm238, %v229, %v245
    %v247 = vsel %vm237, %v244, %v246
    %v248 = vsel %vm236, %v226, %v229
    %v249 = vsel %vm239, %v235, 1326507024
    %v250 = vsel %vm238, %v232, %v249
    %v251 = vsel %vm237, %v248, %v250
    %v252 = vshll.u32 %v212, 8
    %v253 = vmul.u32.u64.compose %v252, %v251
    %v254 = vextract.low.u32 %v253
    %v255 = vextract.high.u32 %v253
    %v256 = vmul.u32.u64.compose %v252, %v247
    %v257 = vextract.low.u32 %v256
    %v258 = vextract.high.u32 %v256
    %v259 = vmul.u32 %v252, %v243
    %v260 = vadd.s32 %v255, %v257
    %vm261 = vc.u32 %v255, %v257
    %v262 = vadd.s32 %v258, 1
    %v263 = vsel %vm261, %v262, %v258
    %v264 = vadd.s32 %v259, %v263
    %v265 = vadd.s32 %v264, 536870912
    %v266 = vshrl.u32 %v265, 30
    %v267 = vshll.u32 %v266, 30
    %v268 = vsub.s32 %v264, %v267
    %vm269 = vcmp.lt.s32.totalorder %v268, 0
    %v270 = vsub.s32 0, %v268
    %v271 = vsel %vm269, %v270, %v268
    %v272 = vclz %v271
    %v273 = vsub.s32 %v272, 2
    %vm274 = vcmp.gt.s32.totalorder 0, %v273
    %v275 = vsel %vm274, 0, %v273
    %v276 = vsub.s32 32, %v275
    %v277 = vshll.u32 %v268, %v275
    %v278 = vshrl.u32 %v260, %v276
    %v279 = vor.u32 %v277, %v278
    %v280 = vsub.s32 4294967266, %v275
    %v281 = vadd.s32 %v280, 127
    %v282 = vshll.u32 %v281, 23
    %v283 = vor.u32 4788187, %v282
    %v284 = vand.u32 2147483647, %v283
    %v286 = vcvt.s32.f32 %v279
    %v287 = vmul.f32 %v286, %v284
    %v288 = vxor.u32 %v287, 2147483648
    %v289 = vsel %vm206, %v288, %v287
    %v290 = vsub.s32 4, %v266
    %v291 = vsel %vm206, %v290, %v266
    %v292 = vsel %vm205, %v196, %v289
    %v293 = vsel %vm205, 0, %v291
    %v294 = vcosq.f32.pop %v292
    %v295 = vsinq.f32.pop %v292
    %vm296 = vweird.f32 %v196
    %v297 = vand.u32 %v293, 3
    %vm298 = vcmp.lt.s32.totalorder %v297, 2
    %vm299 = vcmp.eq.s32.totalorder %v297, 0
    %v300 = vxor.u32 %v295, 2147483648
    %v301 = vsel %vm299, %v294, %v300
    %vm302 = vcmp.eq.s32.totalorder %v297, 2
    %v303 = vxor.u32 %v294, 2147483648
    %v304 = vsel %vm302, %v303, %v295
    %v305 = vsel %vm298, %v301, %v304
    %v306 = vsel %vm296, nan, %v305
    %v307 = vsel %vm197, %v203, %v306
    %v308 = vand.u32 2147483647, %v196
    %vm309 = vcmp.le.f32.partialorder %v308, 0.7853982
    %vm310 = vcmp.lt.s32.totalorder %v196, 0
    %v311 = vand.u32 %v196, 2139095040
    %v312 = vshrl.u32 %v311, 23
    %v313 = vsub.s32 %v312, 127
    %v314 = vand.u32 2147483647, %v196
    %v315 = vand.u32 %v314, 8388607
    %v316 = vor.u32 %v315, 8388608
    %v317 = vsub.s32 0, %v316
    %v318 = vadd.s32 %v313, 1
    %vm319 = vcmp.gt.s32.totalorder %v318, 0
    %v320 = vsel %vm319, %v318, 0
    %v321 = vshrl.u32 %v320, 5
    %v322 = vand.u32 %v320, 31
    %v323 = vsub.s32 32, %v322
    %v324 = vshrl.u32 683565275, %v323
    %v325 = vshll.u32 683565275, %v322
    %v326 = vshrl.u32 2475754826, %v323
    %v327 = vor.u32 %v325, %v326
    %v328 = vshll.u32 2475754826, %v322
    %v329 = vshrl.u32 2131351028, %v323
    %v330 = vor.u32 %v328, %v329
    %v331 = vshll.u32 2131351028, %v322
    %v332 = vshrl.u32 2102212464, %v323
    %v333 = vor.u32 %v331, %v332
    %v334 = vshll.u32 2102212464, %v322
    %v335 = vshrl.u32 920167782, %v323
    %v336 = vor.u32 %v334, %v335
    %v337 = vshll.u32 920167782, %v322
    %v338 = vshrl.u32 1326507024, %v323
    %v339 = vor.u32 %v337, %v338
    %vm340 = vcmp.lt.s32.totalorder %v321, 1
    %vm341 = vcmp.lt.s32.totalorder %v321, 2
    %vm342 = vcmp.lt.s32.totalorder %v321, 3
    %vm343 = vcmp.lt.s32.totalorder %v321, 4
    %v344 = vsel %vm340, %v324, %v327
    %v345 = vsel %vm343, %v333, 2102212464
    %v346 = vsel %vm342, %v330, %v345
    %v347 = vsel %vm341, %v344, %v346
    %v348 = vsel %vm340, %v327, %v330
    %v349 = vsel %vm343, %v336, 920167782
    %v350 = vsel %vm342, %v333, %v349
    %v351 = vsel %vm341, %v348, %v350
    %v352 = vsel %vm340, %v330, %v333
    %v353 = vsel %vm343, %v339, 1326507024
    %v354 = vsel %vm342, %v336, %v353
    %v355 = vsel %vm341, %v352, %v354
    %v356 = vshll.u32 %v316, 8
    %v357 = vmul.u32.u64.compose %v356, %v355
    %v358 = vextract.low.u32 %v357
    %v359 = vextract.high.u32 %v357
    %v360 = vmul.u32.u64.compose %v356, %v351
    %v361 = vextract.low.u32 %v360
    %v362 = vextract.high.u32 %v360
    %v363 = vmul.u32 %v356, %v347
    %v364 = vadd.s32 %v359, %v361
    %vm365 = vc.u32 %v359, %v361
    %v366 = vadd.s32 %v362, 1
    %v367 = vsel %vm365, %v366, %v362
    %v368 = vadd.s32 %v363, %v367
    %v369 = vadd.s32 %v368, 536870912
    %v370 = vshrl.u32 %v369, 30
    %v371 = vshll.u32 %v370, 30
    %v372 = vsub.s32 %v368, %v371
    %vm373 = vcmp.lt.s32.totalorder %v372, 0
    %v374 = vsub.s32 0, %v372
    %v375 = vsel %vm373, %v374, %v372
    %v376 = vclz %v375
    %v377 = vsub.s32 %v376, 2
    %vm378 = vcmp.gt.s32.totalorder 0, %v377
    %v379 = vsel %vm378, 0, %v377
    %v380 = vsub.s32 32, %v379
    %v381 = vshll.u32 %v372, %v379
    %v382 = vshrl.u32 %v364, %v380
    %v383 = vor.u32 %v381, %v382
    %v384 = vsub.s32 4294967266, %v379
    %v385 = vadd.s32 %v384, 127
    %v386 = vshll.u32 %v385, 23
    %v387 = vor.u32 4788187, %v386
    %v388 = vand.u32 2147483647, %v387
    %v390 = vcvt.s32.f32 %v383
    %v391 = vmul.f32 %v390, %v388
    %v392 = vxor.u32 %v391, 2147483648
    %v393 = vsel %vm310, %v392, %v391
    %v394 = vsub.s32 4, %v370
    %v395 = vsel %vm310, %v394, %v370
    %v396 = vsel %vm309, %v196, %v393
    %v397 = vsel %vm309, 0, %v395
    %v398 = vcosq.f32.pop %v396
    %v399 = vsinq.f32.pop %v396
    %vm400 = vweird.f32 %v196
    %v401 = vadd.s32 %v397, 3
    %v402 = vand.u32 %v401, 3
    %vm403 = vcmp.lt.s32.totalorder %v402, 2
    %vm404 = vcmp.eq.s32.totalorder %v402, 0
    %v405 = vxor.u32 %v399, 2147483648
    %v406 = vsel %vm404, %v398, %v405
    %vm407 = vcmp.eq.s32.totalorder %v402, 2
    %v408 = vxor.u32 %v398, 2147483648
    %v409 = vsel %vm407, %v408, %v399
    %v410 = vsel %vm403, %v406, %v409
    %v411 = vsel %vm400, nan, %v410
    %v412 = vmul.f32 %v307, 0.5
    %v413 = vadd.f32 %v412, 0.5
    %v414 = vrcp.pop %v198
    %v415 = vmul.f32 %v411, %v414
    %v416 = vsel %vm197, %v413, %v415
    %v417 = vmul.f32 %v416, 0.5
    %v418 = vsub.f32 1.0, %v307
    %v419 = vrcp.pop %v199
    %v420 = vmul.f32 %v418, %v419
    %v421 = vsel %vm197, %v417, %v420
    %v422 = vmul.f32 %v421, %v180
    %v423 = vmul.f32 %v422, %v180
    %v424 = vadd.f32 %v423, %v307
    %v425 = vmul.f32 %v421, %v182
    %v426 = vmul.f32 %v425, %v182
    %v427 = vadd.f32 %v426, %v307
    %v428 = vmul.f32 %v421, %v184
    %v429 = vmul.f32 %v428, %v184
    %v430 = vadd.f32 %v429, %v307
    %v431 = vmul.f32 %v422, %v182
    %v432 = vmul.f32 %v416, %v184
    %v433 = vsub.f32 %v431, %v432
    %v434 = vmul.f32 %v425, %v180
    %v435 = vadd.f32 %v434, %v432
    %v436 = vmul.f32 %v422, %v184
    %v437 = vmul.f32 %v416, %v182
    %v438 = vadd.f32 %v436, %v437
    %v439 = vmul.f32 %v428, %v180
    %v440 = vsub.f32 %v439, %v437
    %v441 = vmul.f32 %v425, %v184
    %v442 = vmul.f32 %v416, %v180
    %v443 = vsub.f32 %v441, %v442
    %v444 = vmul.f32 %v428, %v182
    %v445 = vadd.f32 %v444, %v442
    %v446 = vld [vmem:[%s2] sm:$0xff]
    %s447 = scalar_lea.vmem %s2, 8
    %v448 = vld [vmem:[%s447] sm:$0xff]
    %s449 = scalar_lea.vmem %s2, 16
    %v450 = vld [vmem:[%s449] sm:$0xff]
    %v451 = vld [vmem:[%s3] sm:$0xff]
    %s452 = scalar_lea.vmem %s3, 8
    %v453 = vld [vmem:[%s452] sm:$0xff]
    %s454 = scalar_lea.vmem %s3, 16
    %v455 = vld [vmem:[%s454] sm:$0xff]
    %v456 = vadd.f32 %v446, %v174
    %457 = vst [vmem:[%s4] sm:$0xff] %v456
    %v458 = vadd.f32 %v448, %v176
    %s459 = scalar_lea.vmem %s4, 8
    %460 = vst [vmem:[%s459] sm:$0xff] %v458
    %v461 = vadd.f32 %v450, %v178
    %s462 = scalar_lea.vmem %s4, 16
    %463 = vst [vmem:[%s462] sm:$0xff] %v461
    %v464 = vmul.f32 %v424, %v451
    %v465 = vmul.f32 %v433, %v453
    %v466 = vadd.f32 %v464, %v465
    %v467 = vmul.f32 %v438, %v455
    %v468 = vadd.f32 %v466, %v467
    %469 = vst [vmem:[%s5] sm:$0xff] %v468
    %v470 = vmul.f32 %v435, %v451
    %v471 = vmul.f32 %v427, %v453
    %v472 = vadd.f32 %v470, %v471
    %v473 = vmul.f32 %v443, %v455
    %v474 = vadd.f32 %v472, %v473
    %s475 = scalar_lea.vmem %s5, 8
    %476 = vst [vmem:[%s475] sm:$0xff] %v474
    %v477 = vmul.f32 %v440, %v451
    %v478 = vmul.f32 %v445, %v453
    %v479 = vadd.f32 %v477, %v478
    %v480 = vmul.f32 %v430, %v455
    %v481 = vadd.f32 %v479, %v480
    %s482 = scalar_lea.vmem %s5, 16
    %483 = vst [vmem:[%s482] sm:$0xff] %v481
    // Predicated region
    $region22: #{apply_pose_correction.1} parent=1 // pred_check
      _
    $region23: #{apply_pose_correction.1} parent=1 // pred_check_branch
      %485 = sbr.rel (0) target = $region25
    $region24: #{apply_pose_correction.1} parent=1 // pred_region
      _
    $region25: #{apply_pose_correction.1} parent=1 // pred_fallthru
      _
    // Predicated region
    $region26: #{apply_pose_correction.1} parent=1 // pred_check
      _
    $region27: #{apply_pose_correction.1} parent=1 // pred_check_branch
      %487 = sbr.rel (0) target = $region29
    $region28: #{apply_pose_correction.1} parent=1 // pred_region
      _
    $region29: #{apply_pose_correction.1} parent=1 // pred_fallthru
      _
    // Predicated region
    $region30: #{apply_pose_correction.1} parent=1 // pred_check
      _
    $region31: #{apply_pose_correction.1} parent=1 // pred_check_branch
      %489 = sbr.rel (0) target = $region33
    $region32: #{apply_pose_correction.1} parent=1 // pred_region
      _
    $region33: #{apply_pose_correction.1} parent=1 // pred_fallthru
      _
    // Predicated region
    $region34: #{apply_pose_correction.1} parent=1 // pred_check
      _
    $region35: #{apply_pose_correction.1} parent=1 // pred_check_branch
      %491 = sbr.rel (0) target = $region37
    $region36: #{apply_pose_correction.1} parent=1 // pred_region
      _
    $region37: #{apply_pose_correction.1} parent=1 // pred_fallthru
      _
    %492 = vsyncpa [#allocation3], 1

</llo_original>
